<compile_context>
chip_gen: v7x
topology: tpu7x:2x2x1
jax: 0.10.0
libtpu: 0.0.40
codegen_flags: <defaults>
</compile_context>

<pallas_src>
import jax
import jax.numpy as jnp
from jax.experimental import pallas as pl
from jax.experimental.pallas import tpu as pltpu


# ---------------------------------------------------------------------------
# helpers
# ---------------------------------------------------------------------------
def _round_up(v, m):
    return -(-v // m) * m


def _pick_tile(dim_pad, cap, step):
    """Largest multiple of `step` that divides dim_pad and is <= cap."""
    t = max(step, min(cap, dim_pad))
    t = (t // step) * step
    while dim_pad % t:
        t -= step
    return t


def _qparams(rmin, rmax, num_bits=8):
    """Qparam.update + calcScaleZeroPoint (unsigned)."""
    qmax = 2.0 ** num_bits - 1.0
    rmax = jnp.maximum(rmax, 0.0)
    rmin = jnp.minimum(rmin, 0.0)
    scale = (rmax - rmin) / qmax
    scale = jnp.where(scale > 0.0, scale, 1.0)   # guard degenerate all-zero tensors
    zero_point = jnp.round(jnp.clip(qmax - rmax / scale, 0.0, qmax))
    return scale.astype(jnp.float32), zero_point.astype(jnp.float32)


# ---------------------------------------------------------------------------
# Kernel A: (Qx - zp_i) @ W^T  (bf16 hi+lo split)  + bias, reduced on the fly
#           to per-i [sum(y), sum(y*y)] over the valid (M,N) region.
#           y is never materialized in HBM.
# ---------------------------------------------------------------------------
def _make_stats_kernel(tm, tn, m_valid, n_valid):
    def kernel(scal_ref, x_ref, whi_ref, wlo_ref, b_ref, stats_ref,
               acc_ref, sums_ref):
        i = pl.program_id(0)
        j = pl.program_id(1)
        k = pl.program_id(2)

        @pl.when(jnp.logical_and(j == 0, k == 0))
        def _():
            sums_ref[0] = 0.0
            sums_ref[1] = 0.0

        @pl.when(k == 0)
        def _():
            acc_ref[...] = jnp.zeros_like(acc_ref)

        # pure bf16 MXU inner loop (no per-tile fake-quant VALU work)
        x = x_ref[...]
        acc_ref[...] += (
            jnp.dot(x, whi_ref[...], preferred_element_type=jnp.float32)
            + jnp.dot(x, wlo_ref[...], preferred_element_type=jnp.float32))

        @pl.when(k == pl.num_programs(2) - 1)
        def _():
            s_i = scal_ref[0]                       # deferred input scale
            y = s_i * acc_ref[...] + b_ref[...]
            # mask padded rows/cols so they contribute 0 to the BN statistics
            row = jax.lax.broadcasted_iota(jnp.int32, (tm, tn), 0) + i * tm
            col = jax.lax.broadcasted_iota(jnp.int32, (tm, tn), 1) + j * tn
            valid = jnp.logical_and(row < m_valid, col < n_valid)
            yv = jnp.where(valid, y, 0.0)
            sums_ref[0] += jnp.sum(yv)
            sums_ref[1] += jnp.sum(yv * yv)

        @pl.when(jnp.logical_and(j == pl.num_programs(1) - 1,
                                 k == pl.num_programs(2) - 1))
        def _():
            # per-i partials -> M axis can be "parallel" (v7x megacore)
            r = jax.lax.broadcasted_iota(jnp.int32, (8, 128), 0)
            c = jax.lax.broadcasted_iota(jnp.int32, (8, 128), 1)
            tile = jnp.where(jnp.logical_and(r == 0, c == 0), sums_ref[0],
                             jnp.where(jnp.logical_and(r == 0, c == 1),
                                       sums_ref[1], 0.0))
            stats_ref[...] = tile

    return kernel


# ---------------------------------------------------------------------------
# Kernel B: (Qx - zp_i) @ (Qw_fold - zp_w)^T  (bf16, exact products), then at
#           k-final: deferred s_i*s_w scale + folded bias + ReLU, plus a
#           masked per-(i,j) tile max for qo (no extra HBM read of the output).
# ---------------------------------------------------------------------------
def _make_fc_relu_kernel(tm, tn, m_valid, n_valid):
    def kernel(scal_ref, x_ref, wq_ref, b_ref, o_ref, rmax_ref, acc_ref):
        i = pl.program_id(0)
        j = pl.program_id(1)
        k = pl.program_id(2)

        @pl.when(k == 0)
        def _():
            acc_ref[...] = jnp.zeros_like(acc_ref)

        acc_ref[...] += jnp.dot(x_ref[...], wq_ref[...],
                                preferred_element_type=jnp.float32)

        @pl.when(k == pl.num_programs(2) - 1)
        def _():
            s_iw = scal_ref[0]                      # s_i * s_w, deferred
            out = jnp.maximum(s_iw * acc_ref[...] + b_ref[...], 0.0)
            o_ref[...] = out
            # padded rows hold relu(b_fold) > 0 -> must be masked out of rmax
            row = jax.lax.broadcasted_iota(jnp.int32, (tm, tn), 0) + i * tm
            col = jax.lax.broadcasted_iota(jnp.int32, (tm, tn), 1) + j * tn
            valid = jnp.logical_and(row < m_valid, col < n_valid)
            tmax = jnp.max(jnp.where(valid, out, 0.0))
            rmax_ref[...] = jnp.full((8, 128), tmax, dtype=jnp.float32)

    return kernel


# ---------------------------------------------------------------------------
# Full forward
# ---------------------------------------------------------------------------
def qfc_bn_relu_forward(x, fc_w, fc_b, bn_gamma, bn_beta, eps=1e-5):
    x = x.astype(jnp.float32)
    fc_w = fc_w.astype(jnp.float32)
    fc_b = fc_b.astype(jnp.float32)
    bn_gamma = bn_gamma.astype(jnp.float32)
    bn_beta = bn_beta.astype(jnp.float32)

    M, K = x.shape
    N = fc_w.shape[0]

    # ---- lane/MXU-friendly padded shapes & tiles --------------------------
    if M >= 128:
        M_pad = _round_up(M, 128)
        tm = _pick_tile(M_pad, 256, 128)
    else:
        M_pad = _round_up(M, 16)        # bf16 sublane packing
        tm = M_pad
    K_pad = _round_up(K, 128)
    N_pad = _round_up(N, 128)
    tk = _pick_tile(K_pad, 1024, 128)   # small-M path: as few k steps as possible
    tn = _pick_tile(N_pad, 1024, 128)
    gm, gn, gk = M_pad // tm, N_pad // tn, K_pad // tk

    vmem_lim = 32 * 1024 * 1024         # > v5e's 16 MiB scoped default, safe everywhere

    # ---- qi + hoisted input fake-quant (computed ONCE, fused with padding) -
    s_i, zp_i = _qparams(jnp.min(x), jnp.max(x))
    # (Qx - zp_i): integer valued, |.| <= 255  ->  exact in bf16.
    q_x = jnp.round(jnp.clip(x / s_i + zp_i, 0.0, 255.0)) - zp_i
    xq_p = jnp.pad(q_x, ((0, M_pad - M), (0, K_pad - K))).astype(jnp.bfloat16)

    # un-folded weight, K-major, split into bf16 hi/lo halves (Kernel A runs
    # on the native bf16 MXU path at ~f32 accuracy for the BN statistics).
    wt = jnp.pad(fc_w.T, ((0, K_pad - K), (0, N_pad - N)))
    wt_hi = wt.astype(jnp.bfloat16)
    wt_lo = (wt - wt_hi.astype(jnp.float32)).astype(jnp.bfloat16)
    b_p = jnp.pad(fc_b, (0, N_pad - N)).reshape(1, N_pad)

    scal_a = jnp.stack([s_i])

    # ---- Kernel A: BN statistics of the un-folded linear output -----------
    stats = pl.pallas_call(
        _make_stats_kernel(tm, tn, M, N),
        out_shape=jax.ShapeDtypeStruct((gm * 8, 128), jnp.float32),
        grid_spec=pltpu.PrefetchScalarGridSpec(
            num_scalar_prefetch=0,
            grid=(gm, gn, gk),
            in_specs=[
                pl.BlockSpec(memory_space=pltpu.MemorySpace.SMEM),        # [s_i]
                pl.BlockSpec((tm, tk), lambda i, j, k: (i, k)),           # Qx - zp_i
                pl.BlockSpec((tk, tn), lambda i, j, k: (k, j)),           # W^T hi
                pl.BlockSpec((tk, tn), lambda i, j, k: (k, j)),           # W^T lo
                pl.BlockSpec((1, tn), lambda i, j, k: (0, j)),            # bias
            ],
            out_specs=pl.BlockSpec((8, 128), lambda i, j, k: (i, 0)),     # per-i partials
            scratch_shapes=[pltpu.VMEM((tm, tn), jnp.float32),
                            pltpu.SMEM((2,), jnp.float32)],
        ),
        compiler_params=pltpu.CompilerParams(
            dimension_semantics=("parallel", "arbitrary", "arbitrary"),
            vmem_limit_bytes=vmem_lim),
    )(scal_a, xq_p, wt_hi, wt_lo, b_p)

    count = float(M * N)
    total = jnp.sum(stats[:, 0])
    total_sq = jnp.sum(stats[:, 1])
    mean = total / count
    # one-pass unbiased variance (torch.var over the flattened output); for
    # huge M*N with a large mean this is less robust than torch's two-pass.
    var = (total_sq - count * mean * mean) / max(count - 1.0, 1.0)
    # TODO(synk): running_mean/running_var momentum update is a stateful module
    # buffer side-effect; it does not affect the returned tensor and is skipped.
    std = jnp.sqrt(var + eps)

    # ---- BN folding + qw + hoisted weight fake-quant (once, in the wrapper)
    gamma_ = bn_gamma / std                                 # broadcast over in_features,
    b_fold = gamma_ * fc_b - gamma_ * mean + bn_beta        # exactly like the PyTorch module
    w_fold = fc_w * gamma_
    s_w, zp_w = _qparams(jnp.min(w_fold), jnp.max(w_fold))
    q_w = jnp.round(jnp.clip(w_fold / s_w + zp_w, 0.0, 255.0)) - zp_w   # integer valued
    wq_t = jnp.pad(q_w.T, ((0, K_pad - K), (0, N_pad - N))).astype(jnp.bfloat16)
    bf_p = jnp.pad(b_fold, (0, N_pad - N)).reshape(1, N_pad)

    scal_b = jnp.stack([s_i * s_w])

    # ---- Kernel B: folded, fake-quantized linear + bias + ReLU + qo max ----
    out2, rmax_slab = pl.pallas_call(
        _make_fc_relu_kernel(tm, tn, M, N),
        out_shape=(jax.ShapeDtypeStruct((M_pad, N_pad), jnp.float32),
                   jax.ShapeDtypeStruct((gm * 8, gn * 128), jnp.float32)),
        grid_spec=pltpu.PrefetchScalarGridSpec(
            num_scalar_prefetch=0,
            grid=(gm, gn, gk),
            in_specs=[
                pl.BlockSpec(memory_space=pltpu.MemorySpace.SMEM),        # [s_i*s_w]
                pl.BlockSpec((tm, tk), lambda i, j, k: (i, k)),           # Qx - zp_i
                pl.BlockSpec((tk, tn), lambda i, j, k: (k, j)),           # Qw_fold - zp_w
                pl.BlockSpec((1, tn), lambda i, j, k: (0, j)),            # b_fold
            ],
            out_specs=[pl.BlockSpec((tm, tn), lambda i, j, k: (i, j)),
                       pl.BlockSpec((8, 128), lambda i, j, k: (i, j))],
            scratch_shapes=[pltpu.VMEM((tm, tn), jnp.float32)],
        ),
        compiler_params=pltpu.CompilerParams(
            dimension_semantics=("parallel", "parallel", "arbitrary"),
            vmem_limit_bytes=vmem_lim),
    )(scal_b, xq_p, wq_t, bf_p)

    # ---- qo + fused epilogue (slice + fake-quant in one XLA elementwise op)
    rmax_o = jnp.max(rmax_slab)                       # ReLU output => rmin is 0
    s_o, zp_o = _qparams(jnp.float32(0.0), rmax_o)
    out_valid = out2[:M, :N]
    out_fq = s_o * (jnp.round(jnp.clip(out_valid / s_o + zp_o, 0.0, 255.0)) - zp_o)
    return out_fq


# ---------------------------------------------------------------------------
if __name__ == "__main__":
    # NOTE: the PyTorch module only broadcasts correctly when
    # in_features == out_features == bn.num_features, so hidden=32 everywhere.
    B, HIDDEN = 8, 32

    key = jax.random.PRNGKey(0)
    kx, kw, kb = jax.random.split(key, 3)

    x = jax.random.normal(kx, (B, HIDDEN), dtype=jnp.float32)

    # nn.Linear-style deterministic init
    bound = 1.0 / (HIDDEN ** 0.5)
    fc_w = jax.random.uniform(kw, (HIDDEN, HIDDEN), jnp.float32, -bound, bound)
    fc_b = jax.random.uniform(kb, (HIDDEN,), jnp.float32, -bound, bound)

    # nn.BatchNorm1d default affine init
    bn_gamma = jnp.ones((HIDDEN,), jnp.float32)
    bn_beta = jnp.zeros((HIDDEN,), jnp.float32)

    out = jax.jit(qfc_bn_relu_forward)(x, fc_w, fc_b, bn_gamma, bn_beta)
    jax.block_until_ready(out)
    assert out.shape == (B, HIDDEN) and out.dtype == jnp.float32
    print("KERNEL_OK")
</pallas_src>

<mosaic_0001>
module attributes {stable_mosaic.version = 11 : i64} {
  func.func @kernel(%arg0: i32, %arg1: i32, %arg2: i32, %arg3: memref<1xf32, #tpu.memory_space<smem>>, %arg4: memref<16x128xbf16, #tpu.memory_space<vmem>>, %arg5: memref<128x128xbf16, #tpu.memory_space<vmem>>, %arg6: memref<128x128xbf16, #tpu.memory_space<vmem>>, %arg7: memref<1x128xf32, #tpu.memory_space<vmem>>, %arg8: memref<8x128xf32, #tpu.memory_space<vmem>>, %arg9: memref<16x128xf32, #tpu.memory_space<vmem>>, %arg10: memref<2xf32, #tpu.memory_space<smem>>) attributes {dimension_semantics = [#tpu.dimension_semantics<parallel>, #tpu.dimension_semantics<arbitrary>, #tpu.dimension_semantics<arbitrary>], iteration_bounds = array<i64: 1, 1, 1>, scalar_prefetch = 0 : i64, scratch_operands = 2 : i64, tpu.core_type = #tpu.core_type<tc>, window_params = [{transform_indices = @transform_0, window_bounds = array<i64: 1>}, {transform_indices = @transform_1, window_bounds = array<i64: 16, 128>}, {transform_indices = @transform_2, window_bounds = array<i64: 128, 128>}, {transform_indices = @transform_3, window_bounds = array<i64: 128, 128>}, {transform_indices = @transform_4, window_bounds = array<i64: 1, 128>}, {transform_indices = @transform_5, window_bounds = array<i64: 8, 128>}]} {
    %c0_i32 = arith.constant 0 : i32
    %0 = arith.cmpi eq, %arg1, %c0_i32 : i32
    %c0_i32_0 = arith.constant 0 : i32
    %1 = arith.cmpi eq, %arg2, %c0_i32_0 : i32
    %2 = arith.andi %0, %1 : i1
    %3 = arith.extui %2 : i1 to i32
    %c0_i32_1 = arith.constant 0 : i32
    %4 = arith.cmpi ne, %3, %c0_i32_1 : i32
    scf.if %4 {
      %cst_19 = arith.constant 0.000000e+00 : f32
      %c0_20 = arith.constant 0 : index
      %25 = memref.load %arg10[%c0_20] : memref<2xf32, #tpu.memory_space<smem>>
      memref.store %cst_19, %arg10[%c0_20] : memref<2xf32, #tpu.memory_space<smem>>
      %cst_21 = arith.constant 0.000000e+00 : f32
      %c1 = arith.constant 1 : index
      %26 = memref.load %arg10[%c1] : memref<2xf32, #tpu.memory_space<smem>>
      memref.store %cst_21, %arg10[%c1] : memref<2xf32, #tpu.memory_space<smem>>
    } else {
    }
    %c0_i32_2 = arith.constant 0 : i32
    %5 = arith.cmpi eq, %arg2, %c0_i32_2 : i32
    %6 = arith.extui %5 : i1 to i32
    %c0_i32_3 = arith.constant 0 : i32
    %7 = arith.cmpi ne, %6, %c0_i32_3 : i32
    scf.if %7 {
      %cst_19 = arith.constant 0.000000e+00 : f32
      %25 = vector.broadcast %cst_19 : f32 to vector<16x128xf32>
      %c0_20 = arith.constant 0 : index
      %c0_21 = arith.constant 0 : index
      %26 = vector.load %arg9[%c0_20, %c0_21] : memref<16x128xf32, #tpu.memory_space<vmem>>, vector<16x128xf32>
      tpu.vector_store %arg9[%c0_20, %c0_21], %25 {strides = array<i32>} : memref<16x128xf32, #tpu.memory_space<vmem>>, vector<16x128xf32>,
    } else {
    }
    %c0 = arith.constant 0 : index
    %c0_4 = arith.constant 0 : index
    %8 = vector.load %arg4[%c0, %c0_4] : memref<16x128xbf16, #tpu.memory_space<vmem>>, vector<16x128xbf16>
    %c0_5 = arith.constant 0 : index
    %c0_6 = arith.constant 0 : index
    %9 = vector.load %arg9[%c0_5, %c0_6] : memref<16x128xf32, #tpu.memory_space<vmem>>, vector<16x128xf32>
    %c0_7 = arith.constant 0 : index
    %c0_8 = arith.constant 0 : index
    %10 = vector.load %arg5[%c0_7, %c0_8] : memref<128x128xbf16, #tpu.memory_space<vmem>>, vector<128x128xbf16>
    %cst = arith.constant dense<0.000000e+00> : vector<16x128xf32>
    %11 = tpu.matmul %8, %10, %cst {dimension_numbers = #tpu.dot_dimension_numbers<[1], [0], [0], [1], [0, 0, 1, 1], [], []>} : vector<16x128xbf16>, vector<128x128xbf16>, vector<16x128xf32> -> vector<16x128xf32>
    %c0_9 = arith.constant 0 : index
    %c0_10 = arith.constant 0 : index
    %12 = vector.load %arg6[%c0_9, %c0_10] : memref<128x128xbf16, #tpu.memory_space<vmem>>, vector<128x128xbf16>
    %cst_11 = arith.constant dense<0.000000e+00> : vector<16x128xf32>
    %13 = tpu.matmul %8, %12, %cst_11 {dimension_numbers = #tpu.dot_dimension_numbers<[1], [0], [0], [1], [0, 0, 1, 1], [], []>} : vector<16x128xbf16>, vector<128x128xbf16>, vector<16x128xf32> -> vector<16x128xf32>
    %14 = arith.addf %11, %13 : vector<16x128xf32>
    %15 = arith.addf %9, %14 : vector<16x128xf32>
    %c0_12 = arith.constant 0 : index
    %c0_13 = arith.constant 0 : index
    %16 = vector.load %arg9[%c0_12, %c0_13] : memref<16x128xf32, #tpu.memory_space<vmem>>, vector<16x128xf32>
    tpu.vector_store %arg9[%c0_12, %c0_13], %15 {strides = array<i32>} : memref<16x128xf32, #tpu.memory_space<vmem>>, vector<16x128xf32>,
    %c0_i32_14 = arith.constant 0 : i32
    %17 = arith.cmpi eq, %arg2, %c0_i32_14 : i32
    %18 = arith.extui %17 : i1 to i32
    %c0_i32_15 = arith.constant 0 : i32
    %19 = arith.cmpi ne, %18, %c0_i32_15 : i32
    scf.if %19 {
      %c0_19 = arith.constant 0 : index
      %25 = memref.load %arg3[%c0_19] : memref<1xf32, #tpu.memory_space<smem>>
      %c0_20 = arith.constant 0 : index
      %c0_21 = arith.constant 0 : index
      %26 = vector.load %arg9[%c0_20, %c0_21] : memref<16x128xf32, #tpu.memory_space<vmem>>, vector<16x128xf32>
      %27 = vector.broadcast %25 : f32 to vector<16x128xf32>
      %28 = arith.mulf %27, %26 : vector<16x128xf32>
      %c0_22 = arith.constant 0 : index
      %c0_23 = arith.constant 0 : index
      %29 = vector.load %arg7[%c0_22, %c0_23] : memref<1x128xf32, #tpu.memory_space<vmem>>, vector<1x128xf32>
      %30 = vector.broadcast %29 : vector<1x128xf32> to vector<16x128xf32>
      %31 = arith.addf %28, %30 : vector<16x128xf32>
      %32 = tpu.iota {dimensions = array<i32: 0>} : vector<16x128xi32>
      %c16_i32 = arith.constant 16 : i32
      %33 = arith.muli %arg0, %c16_i32 : i32
      %34 = vector.broadcast %33 : i32 to vector<16x128xi32>
      %35 = arith.addi %32, %34 : vector<16x128xi32>
      %36 = tpu.iota {dimensions = array<i32: 1>} : vector<16x128xi32>
      %c128_i32 = arith.constant 128 : i32
      %37 = arith.muli %arg1, %c128_i32 : i32
      %38 = vector.broadcast %37 : i32 to vector<16x128xi32>
      %39 = arith.addi %36, %38 : vector<16x128xi32>
      %c8_i32 = arith.constant 8 : i32
      %40 = vector.broadcast %c8_i32 : i32 to vector<16x128xi32>
      %41 = arith.cmpi slt, %35, %40 : vector<16x128xi32>
      %c32_i32 = arith.constant 32 : i32
      %42 = vector.broadcast %c32_i32 : i32 to vector<16x128xi32>
      %43 = arith.cmpi slt, %39, %42 : vector<16x128xi32>
      %44 = arith.andi %41, %43 : vector<16x128xi1>
      %cst_24 = arith.constant 0.000000e+00 : f32
      %45 = vector.broadcast %cst_24 : f32 to vector<16x128xf32>
      %46 = arith.select %44, %31, %45 : vector<16x128xi1>, vector<16x128xf32>
      %c0_25 = arith.constant 0 : index
      %47 = memref.load %arg10[%c0_25] : memref<2xf32, #tpu.memory_space<smem>>
      %48 = vector.shape_cast %46 : vector<16x128xf32> to vector<1x16x128xf32>
      %cst_26 = arith.constant dense<0.000000e+00> : vector<1xf32>
      %49 = vector.multi_reduction <add>, %48, %cst_26 [1, 2] : vector<1x16x128xf32> to vector<1xf32>
      %50 = vector.shape_cast %49 : vector<1xf32> to vector<1x1x1xf32>
      %51 = vector.extract %50[0, 0, 0] : f32 from vector<1x1x1xf32>
      %52 = arith.addf %47, %51 : f32
      %c0_27 = arith.constant 0 : index
      %53 = memref.load %arg10[%c0_27] : memref<2xf32, #tpu.memory_space<smem>>
      memref.store %52, %arg10[%c0_27] : memref<2xf32, #tpu.memory_space<smem>>
      %c1 = arith.constant 1 : index
      %54 = memref.load %arg10[%c1] : memref<2xf32, #tpu.memory_space<smem>>
      %55 = arith.mulf %46, %46 : vector<16x128xf32>
      %56 = vector.shape_cast %55 : vector<16x128xf32> to vector<1x16x128xf32>
      %cst_28 = arith.constant dense<0.000000e+00> : vector<1xf32>
      %57 = vector.multi_reduction <add>, %56, %cst_28 [1, 2] : vector<1x16x128xf32> to vector<1xf32>
      %58 = vector.shape_cast %57 : vector<1xf32> to vector<1x1x1xf32>
      %59 = vector.extract %58[0, 0, 0] : f32 from vector<1x1x1xf32>
      %60 = arith.addf %54, %59 : f32
      %c1_29 = arith.constant 1 : index
      %61 = memref.load %arg10[%c1_29] : memref<2xf32, #tpu.memory_space<smem>>
      memref.store %60, %arg10[%c1_29] : memref<2xf32, #tpu.memory_space<smem>>
    } else {
    }
    %c0_i32_16 = arith.constant 0 : i32
    %20 = arith.cmpi eq, %arg1, %c0_i32_16 : i32
    %c0_i32_17 = arith.constant 0 : i32
    %21 = arith.cmpi eq, %arg2, %c0_i32_17 : i32
    %22 = arith.andi %20, %21 : i1
    %23 = arith.extui %22 : i1 to i32
    %c0_i32_18 = arith.constant 0 : i32
    %24 = arith.cmpi ne, %23, %c0_i32_18 : i32
    scf.if %24 {
      %25 = tpu.iota {dimensions = array<i32: 0>} : vector<8x128xi32>
      %26 = tpu.iota {dimensions = array<i32: 1>} : vector<8x128xi32>
      %c0_i32_19 = arith.constant 0 : i32
      %27 = vector.broadcast %c0_i32_19 : i32 to vector<8x128xi32>
      %28 = arith.cmpi eq, %25, %27 : vector<8x128xi32>
      %c0_i32_20 = arith.constant 0 : i32
      %29 = vector.broadcast %c0_i32_20 : i32 to vector<8x128xi32>
      %30 = arith.cmpi eq, %26, %29 : vector<8x128xi32>
      %31 = arith.andi %28, %30 : vector<8x128xi1>
      %c0_21 = arith.constant 0 : index
      %32 = memref.load %arg10[%c0_21] : memref<2xf32, #tpu.memory_space<smem>>
      %c0_i32_22 = arith.constant 0 : i32
      %33 = vector.broadcast %c0_i32_22 : i32 to vector<8x128xi32>
      %34 = arith.cmpi eq, %25, %33 : vector<8x128xi32>
      %c1_i32 = arith.constant 1 : i32
      %35 = vector.broadcast %c1_i32 : i32 to vector<8x128xi32>
      %36 = arith.cmpi eq, %26, %35 : vector<8x128xi32>
      %37 = arith.andi %34, %36 : vector<8x128xi1>
      %c1 = arith.constant 1 : index
      %38 = memref.load %arg10[%c1] : memref<2xf32, #tpu.memory_space<smem>>
      %cst_23 = arith.constant 0.000000e+00 : f32
      %39 = vector.broadcast %38 : f32 to vector<8x128xf32>
      %40 = vector.broadcast %cst_23 : f32 to vector<8x128xf32>
      %41 = arith.select %37, %39, %40 : vector<8x128xi1>, vector<8x128xf32>
      %42 = vector.broadcast %32 : f32 to vector<8x128xf32>
      %43 = arith.select %31, %42, %41 : vector<8x128xi1>, vector<8x128xf32>
      %c0_24 = arith.constant 0 : index
      %c0_25 = arith.constant 0 : index
      %44 = vector.load %arg8[%c0_24, %c0_25] : memref<8x128xf32, #tpu.memory_space<vmem>>, vector<8x128xf32>
      tpu.vector_store %arg8[%c0_24, %c0_25], %43 {strides = array<i32>} : memref<8x128xf32, #tpu.memory_space<vmem>>, vector<8x128xf32>,
    } else {
    }
    return
  }
  func.func @transform_0(%arg0: i32, %arg1: i32, %arg2: i32) -> i32 {
    %c0_i32 = arith.constant 0 : i32
    %c0_i32_0 = arith.constant 0 : i32
    return %c0_i32 : i32
  }
  func.func @transform_1(%arg0: i32, %arg1: i32, %arg2: i32) -> (i32, i32) {
    %c0_i32 = arith.constant 0 : i32
    return %arg0, %arg2 : i32, i32
  }
  func.func @transform_2(%arg0: i32, %arg1: i32, %arg2: i32) -> (i32, i32) {
    %c0_i32 = arith.constant 0 : i32
    return %arg2, %arg1 : i32, i32
  }
  func.func @transform_3(%arg0: i32, %arg1: i32, %arg2: i32) -> (i32, i32) {
    %c0_i32 = arith.constant 0 : i32
    return %arg2, %arg1 : i32, i32
  }
  func.func @transform_4(%arg0: i32, %arg1: i32, %arg2: i32) -> (i32, i32) {
    %c0_i32 = arith.constant 0 : i32
    %c0_i32_0 = arith.constant 0 : i32
    return %c0_i32, %arg1 : i32, i32
  }
  func.func @transform_5(%arg0: i32, %arg1: i32, %arg2: i32) -> (i32, i32) {
    %c0_i32 = arith.constant 0 : i32
    %c0_i32_0 = arith.constant 0 : i32
    return %arg0, %c0_i32 : i32, i32
  }
}

module attributes {stable_mosaic.version = 11 : i64} {
  func.func @kernel(%arg0: i32, %arg1: i32, %arg2: i32, %arg3: memref<1xf32, #tpu.memory_space<smem>>, %arg4: memref<16x128xbf16, #tpu.memory_space<vmem>>, %arg5: memref<128x128xbf16, #tpu.memory_space<vmem>>, %arg6: memref<1x128xf32, #tpu.memory_space<vmem>>, %arg7: memref<16x128xf32, #tpu.memory_space<vmem>>, %arg8: memref<8x128xf32, #tpu.memory_space<vmem>>, %arg9: memref<16x128xf32, #tpu.memory_space<vmem>>) attributes {dimension_semantics = [#tpu.dimension_semantics<parallel>, #tpu.dimension_semantics<parallel>, #tpu.dimension_semantics<arbitrary>], iteration_bounds = array<i64: 1, 1, 1>, scalar_prefetch = 0 : i64, scratch_operands = 1 : i64, tpu.core_type = #tpu.core_type<tc>, window_params = [{transform_indices = @transform_0, window_bounds = array<i64: 1>}, {transform_indices = @transform_1, window_bounds = array<i64: 16, 128>}, {transform_indices = @transform_2, window_bounds = array<i64: 128, 128>}, {transform_indices = @transform_3, window_bounds = array<i64: 1, 128>}, {transform_indices = @transform_4, window_bounds = array<i64: 16, 128>}, {transform_indices = @transform_5, window_bounds = array<i64: 8, 128>}]} {
    %c0_i32 = arith.constant 0 : i32
    %0 = arith.cmpi eq, %arg2, %c0_i32 : i32
    %1 = arith.extui %0 : i1 to i32
    %c0_i32_0 = arith.constant 0 : i32
    %2 = arith.cmpi ne, %1, %c0_i32_0 : i32
    scf.if %2 {
      %cst_10 = arith.constant 0.000000e+00 : f32
      %12 = vector.broadcast %cst_10 : f32 to vector<16x128xf32>
      %c0_11 = arith.constant 0 : index
      %c0_12 = arith.constant 0 : index
      %13 = vector.load %arg9[%c0_11, %c0_12] : memref<16x128xf32, #tpu.memory_space<vmem>>, vector<16x128xf32>
      tpu.vector_store %arg9[%c0_11, %c0_12], %12 {strides = array<i32>} : memref<16x128xf32, #tpu.memory_space<vmem>>, vector<16x128xf32>,
    } else {
    }
    %c0 = arith.constant 0 : index
    %c0_1 = arith.constant 0 : index
    %3 = vector.load %arg9[%c0, %c0_1] : memref<16x128xf32, #tpu.memory_space<vmem>>, vector<16x128xf32>
    %c0_2 = arith.constant 0 : index
    %c0_3 = arith.constant 0 : index
    %4 = vector.load %arg4[%c0_2, %c0_3] : memref<16x128xbf16, #tpu.memory_space<vmem>>, vector<16x128xbf16>
    %c0_4 = arith.constant 0 : index
    %c0_5 = arith.constant 0 : index
    %5 = vector.load %arg5[%c0_4, %c0_5] : memref<128x128xbf16, #tpu.memory_space<vmem>>, vector<128x128xbf16>
    %cst = arith.constant dense<0.000000e+00> : vector<16x128xf32>
    %6 = tpu.matmul %4, %5, %cst {dimension_numbers = #tpu.dot_dimension_numbers<[1], [0], [0], [1], [0, 0, 1, 1], [], []>} : vector<16x128xbf16>, vector<128x128xbf16>, vector<16x128xf32> -> vector<16x128xf32>
    %7 = arith.addf %3, %6 : vector<16x128xf32>
    %c0_6 = arith.constant 0 : index
    %c0_7 = arith.constant 0 : index
    %8 = vector.load %arg9[%c0_6, %c0_7] : memref<16x128xf32, #tpu.memory_space<vmem>>, vector<16x128xf32>
    tpu.vector_store %arg9[%c0_6, %c0_7], %7 {strides = array<i32>} : memref<16x128xf32, #tpu.memory_space<vmem>>, vector<16x128xf32>,
    %c0_i32_8 = arith.constant 0 : i32
    %9 = arith.cmpi eq, %arg2, %c0_i32_8 : i32
    %10 = arith.extui %9 : i1 to i32
    %c0_i32_9 = arith.constant 0 : i32
    %11 = arith.cmpi ne, %10, %c0_i32_9 : i32
    scf.if %11 {
      %c0_10 = arith.constant 0 : index
      %12 = memref.load %arg3[%c0_10] : memref<1xf32, #tpu.memory_space<smem>>
      %c0_11 = arith.constant 0 : index
      %c0_12 = arith.constant 0 : index
      %13 = vector.load %arg9[%c0_11, %c0_12] : memref<16x128xf32, #tpu.memory_space<vmem>>, vector<16x128xf32>
      %14 = vector.broadcast %12 : f32 to vector<16x128xf32>
      %15 = arith.mulf %14, %13 : vector<16x128xf32>
      %c0_13 = arith.constant 0 : index
      %c0_14 = arith.constant 0 : index
      %16 = vector.load %arg6[%c0_13, %c0_14] : memref<1x128xf32, #tpu.memory_space<vmem>>, vector<1x128xf32>
      %17 = vector.broadcast %16 : vector<1x128xf32> to vector<16x128xf32>
      %18 = arith.addf %15, %17 : vector<16x128xf32>
      %cst_15 = arith.constant 0.000000e+00 : f32
      %19 = vector.broadcast %cst_15 : f32 to vector<16x128xf32>
      %20 = arith.maximumf %18, %19 : vector<16x128xf32>
      %c0_16 = arith.constant 0 : index
      %c0_17 = arith.constant 0 : index
      %21 = vector.load %arg7[%c0_16, %c0_17] : memref<16x128xf32, #tpu.memory_space<vmem>>, vector<16x128xf32>
      tpu.vector_store %arg7[%c0_16, %c0_17], %20 {strides = array<i32>} : memref<16x128xf32, #tpu.memory_space<vmem>>, vector<16x128xf32>,
      %22 = tpu.iota {dimensions = array<i32: 0>} : vector<16x128xi32>
      %c16_i32 = arith.constant 16 : i32
      %23 = arith.muli %arg0, %c16_i32 : i32
      %24 = vector.broadcast %23 : i32 to vector<16x128xi32>
      %25 = arith.addi %22, %24 : vector<16x128xi32>
      %26 = tpu.iota {dimensions = array<i32: 1>} : vector<16x128xi32>
      %c128_i32 = arith.constant 128 : i32
      %27 = arith.muli %arg1, %c128_i32 : i32
      %28 = vector.broadcast %27 : i32 to vector<16x128xi32>
      %29 = arith.addi %26, %28 : vector<16x128xi32>
      %c8_i32 = arith.constant 8 : i32
      %30 = vector.broadcast %c8_i32 : i32 to vector<16x128xi32>
      %31 = arith.cmpi slt, %25, %30 : vector<16x128xi32>
      %c32_i32 = arith.constant 32 : i32
      %32 = vector.broadcast %c32_i32 : i32 to vector<16x128xi32>
      %33 = arith.cmpi slt, %29, %32 : vector<16x128xi32>
      %34 = arith.andi %31, %33 : vector<16x128xi1>
      %cst_18 = arith.constant 0.000000e+00 : f32
      %35 = vector.broadcast %cst_18 : f32 to vector<16x128xf32>
      %36 = arith.select %34, %20, %35 : vector<16x128xi1>, vector<16x128xf32>
      %37 = vector.shape_cast %36 : vector<16x128xf32> to vector<1x16x128xf32>
      %cst_19 = arith.constant dense<0xFF800000> : vector<1xf32>
      %38 = vector.multi_reduction <maximumf>, %37, %cst_19 [1, 2] : vector<1x16x128xf32> to vector<1xf32>
      %39 = vector.shape_cast %38 : vector<1xf32> to vector<1x1x1xf32>
      %40 = vector.extract %39[0, 0, 0] : f32 from vector<1x1x1xf32>
      %41 = vector.broadcast %40 : f32 to vector<8x128xf32>
      %c0_20 = arith.constant 0 : index
      %c0_21 = arith.constant 0 : index
      %42 = vector.load %arg8[%c0_20, %c0_21] : memref<8x128xf32, #tpu.memory_space<vmem>>, vector<8x128xf32>
      tpu.vector_store %arg8[%c0_20, %c0_21], %41 {strides = array<i32>} : memref<8x128xf32, #tpu.memory_space<vmem>>, vector<8x128xf32>,
    } else {
    }
    return
  }
  func.func @transform_0(%arg0: i32, %arg1: i32, %arg2: i32) -> i32 {
    %c0_i32 = arith.constant 0 : i32
    %c0_i32_0 = arith.constant 0 : i32
    return %c0_i32 : i32
  }
  func.func @transform_1(%arg0: i32, %arg1: i32, %arg2: i32) -> (i32, i32) {
    %c0_i32 = arith.constant 0 : i32
    return %arg0, %arg2 : i32, i32
  }
  func.func @transform_2(%arg0: i32, %arg1: i32, %arg2: i32) -> (i32, i32) {
    %c0_i32 = arith.constant 0 : i32
    return %arg2, %arg1 : i32, i32
  }
  func.func @transform_3(%arg0: i32, %arg1: i32, %arg2: i32) -> (i32, i32) {
    %c0_i32 = arith.constant 0 : i32
    %c0_i32_0 = arith.constant 0 : i32
    return %c0_i32, %arg1 : i32, i32
  }
  func.func @transform_4(%arg0: i32, %arg1: i32, %arg2: i32) -> (i32, i32) {
    %c0_i32 = arith.constant 0 : i32
    return %arg0, %arg1 : i32, i32
  }
  func.func @transform_5(%arg0: i32, %arg1: i32, %arg2: i32) -> (i32, i32) {
    %c0_i32 = arith.constant 0 : i32
    return %arg0, %arg1 : i32, i32
  }
}

</mosaic_0001>

<llo_original>
// kernel: qfc_bn_relu_forward.3
$region0: #{qfc_bn_relu_forward.3}
  #allocation0 [shape = 'u32[]', space=smem, size = 0x4, offset = 0x4, fixed_abs, tag = 'smem constant byte address 0x4 - core index']
  #allocation1 [shape = 'u32[144,128]{1,0:T(1,128)}', space=vmem, size = 0x12000, scoped, tag = 'internal scratch']
  #allocation2 [shape = 'f32[16,128]{1,0:T(8,128)}', space=vmem, size = 0x2000, scoped, tag = 'scratch operand']
  #allocation3 [shape = 'f32[1]{0:T(128)S(6)}', space=smem, size = 0x200, scoped, tag = 'scoped memory for qfc_bn_relu_forward.3']
  %s0 = inlined_call_operand.<no memory space> [shape: f32[1], index: 0, kind: input, shape index: {}]
  %s1 = inlined_call_operand.vmem [shape: bf16[16,128], index: 1, kind: input, shape index: {}]
  %s2 = inlined_call_operand.vmem [shape: bf16[128,128], index: 2, kind: input, shape index: {}]
  %s3 = inlined_call_operand.vmem [shape: f32[1,128], index: 3, kind: input, shape index: {}]
  %s4 = inlined_call_operand.vmem [shape: f32[16,128], index: 4, kind: output, shape index: {0}]
  %s5 = inlined_call_operand.vmem [shape: f32[8,128], index: 5, kind: output, shape index: {1}]
  %6 = xla_tuple %s4, %s5
  %s7 = sld [smem:[#allocation0]]
  $region42: #{qfc_bn_relu_forward.3} parent=0
    _
  %s9 = ssub.s32 1, %s7
  %s10 = scalar_select 0, %s9, %s7
  %11 = sst [smem:[#allocation3]] %s0
  // Predicated region
  $region2: #{qfc_bn_relu_forward.3} parent=0 // pred_check
    _
  $region3: #{qfc_bn_relu_forward.3} parent=0 // pred_check_branch
    %13 = sbr.rel (0) target = $region5
  $region4: #{qfc_bn_relu_forward.3} parent=0 // pred_region
    _
  $region5: #{qfc_bn_relu_forward.3} parent=0 // pred_fallthru
    _
  // Predicated region
  $region6: #{qfc_bn_relu_forward.3} parent=0 // pred_check
    _
  $region7: #{qfc_bn_relu_forward.3} parent=0 // pred_check_branch
    %15 = sbr.rel (0) target = $region9
  $region8: #{qfc_bn_relu_forward.3} parent=0 // pred_region
    _
  $region9: #{qfc_bn_relu_forward.3} parent=0 // pred_fallthru
    _
  // Predicated region
  $region10: #{qfc_bn_relu_forward.3} parent=0 // pred_check
    _
  $region11: #{qfc_bn_relu_forward.3} parent=0 // pred_check_branch
    %17 = sbr.rel (0) target = $region13
  $region12: #{qfc_bn_relu_forward.3} parent=0 // pred_region
    _
  $region13: #{qfc_bn_relu_forward.3} parent=0 // pred_fallthru
    _
  // Predicated region
  $region14: #{qfc_bn_relu_forward.3} parent=0 // pred_check
    _
  $region15: #{qfc_bn_relu_forward.3} parent=0 // pred_check_branch
    %19 = sbr.rel (0) target = $region17
  $region16: #{qfc_bn_relu_forward.3} parent=0 // pred_region
    _
  $region17: #{qfc_bn_relu_forward.3} parent=0 // pred_fallthru
    _
  %p21 = scmp.eq.s32.totalorder 0, 0
  // Predicated region
  $region18: #{qfc_bn_relu_forward.3} parent=0 // pred_check
    %p22 = pneg %p21
  $region19: #{qfc_bn_relu_forward.3} parent=0 // pred_check_branch
    %24 = sbr.rel (%p22) target = $region21
  $region20: #{qfc_bn_relu_forward.3} parent=0 // pred_region
    %25 = vst [vmem:[#allocation2] sm:$0xff] 0.0
    %26 = vst [vmem:[#allocation2 + $0x8] sm:$0xff] 0.0
  $region21: #{qfc_bn_relu_forward.3} parent=0 // pred_fallthru
    _
  %v27 = vld [vmem:[#allocation2] sm:$0xff]
  %v28 = vld [vmem:[#allocation2 + $0x8] sm:$0xff]
  %v29 = vld [vmem:[%s1] sm:$0xf]
  %v30 = vld [vmem:[%s1 + $0x4] sm:$0xf]
  %v31 = vld [vmem:[%s2] sm:$0xf]
  %v32 = vld [vmem:[%s2 + $0x4] sm:$0xf]
  %v33 = vld [vmem:[%s2 + $0x8] sm:$0xf]
  %v34 = vld [vmem:[%s2 + $0xc] sm:$0xf]
  %v35 = vld [vmem:[%s2 + $0x10] sm:$0xf]
  %v36 = vld [vmem:[%s2 + $0x14] sm:$0xf]
  %v37 = vld [vmem:[%s2 + $0x18] sm:$0xf]
  %v38 = vld [vmem:[%s2 + $0x1c] sm:$0xf]
  %v39 = vld [vmem:[%s2 + $0x20] sm:$0xf]
  %v40 = vld [vmem:[%s2 + $0x24] sm:$0xf]
  %v41 = vld [vmem:[%s2 + $0x28] sm:$0xf]
  %v42 = vld [vmem:[%s2 + $0x2c] sm:$0xf]
  %v43 = vld [vmem:[%s2 + $0x30] sm:$0xf]
  %v44 = vld [vmem:[%s2 + $0x34] sm:$0xf]
  %v45 = vld [vmem:[%s2 + $0x38] sm:$0xf]
  %v46 = vld [vmem:[%s2 + $0x3c] sm:$0xf]
  %v49 = vunpack.c.l.b16 %v29
  %v50 = vunpack.c.l.b16 %v30
  %v51 = vpack.c.b16 %v50, %v49
  %v69 = vunpack.c.l.b16 %v31
  %v70 = vunpack.c.l.b16 %v32
  %v71 = vunpack.c.l.b16 %v33
  %v72 = vunpack.c.l.b16 %v34
  %v73 = vunpack.c.l.b16 %v35
  %v74 = vunpack.c.l.b16 %v36
  %v75 = vunpack.c.l.b16 %v37
  %v76 = vunpack.c.l.b16 %v38
  %v77 = vunpack.c.l.b16 %v39
  %v78 = vunpack.c.l.b16 %v40
  %v79 = vunpack.c.l.b16 %v41
  %v80 = vunpack.c.l.b16 %v42
  %v81 = vunpack.c.l.b16 %v43
  %v82 = vunpack.c.l.b16 %v44
  %v83 = vunpack.c.l.b16 %v45
  %v84 = vunpack.c.l.b16 %v46
  %v85 = vpack.c.b16 %v70, %v69
  %v86 = vpack.c.b16 %v72, %v71
  %v87 = vpack.c.b16 %v74, %v73
  %v88 = vpack.c.b16 %v76, %v75
  %v89 = vpack.c.b16 %v78, %v77
  %v90 = vpack.c.b16 %v80, %v79
  %v91 = vpack.c.b16 %v82, %v81
  %v92 = vpack.c.b16 %v84, %v83
  %101 = vmatprep.subr.bf16.mxu0 0
  %102 = vmatpush1.bf16.msra.mxu0 %v85
  %103 = vmatprep.subr.bf16.mxu0 0
  %104 = vmatpush1.bf16.msra.mxu0 %v86
  %105 = vmatprep.subr.bf16.mxu0 0
  %106 = vmatpush1.bf16.msra.mxu0 %v87
  %107 = vmatprep.subr.bf16.mxu0 0
  %108 = vmatpush1.bf16.msra.mxu0 %v88
  %109 = vmatprep.subr.bf16.mxu0 0
  %110 = vmatpush1.bf16.msra.mxu0 %v89
  %111 = vmatprep.subr.bf16.mxu0 0
  %112 = vmatpush1.bf16.msra.mxu0 %v90
  %113 = vmatprep.subr.bf16.mxu0 0
  %114 = vmatpush1.bf16.msra.mxu0 %v91
  %115 = vmatprep.subr.bf16.mxu0 0
  %116 = vmatpush1.bf16.msra.mxu0 %v92
  %117 = vmatprep.subr.bf16.mxu0 0
  %118 = vmatpush1.bf16.msra.mxu0 0
  %119 = vmatprep.subr.bf16.mxu0 0
  %120 = vmatpush1.bf16.msra.mxu0 0
  %121 = vmatprep.subr.bf16.mxu0 0
  %122 = vmatpush1.bf16.msra.mxu0 0
  %123 = vmatprep.subr.bf16.mxu0 0
  %124 = vmatpush1.bf16.msra.mxu0 0
  %125 = vmatprep.subr.bf16.mxu0 0
  %126 = vmatpush1.bf16.msra.mxu0 0
  %127 = vmatprep.subr.bf16.mxu0 0
  %128 = vmatpush1.bf16.msra.mxu0 0
  %129 = vmatprep.subr.bf16.mxu0 0
  %130 = vmatpush1.bf16.msra.mxu0 0
  %131 = vmatprep.subr.bf16.mxu0 0
  %132 = vmatpush1.bf16.msra.mxu0 0
  %133 = vmatprep.mubr.bf16.mxu0 0
  %134 = vmatmul.mubr.bf16.gmra.mrb[0].mxu0 %v51
  %v135 = vpop.f32.mrb[0].mxu0
  %v136 = vadd.f32 0.0, %v135
  %v137 = vpop.f32.mrb[0].mxu0
  %v138 = vpop.f32.mrb[0].mxu0
  %v139 = vadd.f32 0.0, %v138
  %v140 = vpop.f32.mrb[0].mxu0
  %141 = vdwg.mxu0
  %v142 = vadd.f32 %v27, %v136
  %v143 = vadd.f32 %v28, %v139
  %144 = vst [vmem:[#allocation2] sm:$0xff] %v142
  %145 = vst [vmem:[#allocation2 + $0x8] sm:$0xff] %v143
  // Predicated region
  $region22: #{qfc_bn_relu_forward.3} parent=0 // pred_check
    %p146 = pneg %p21
  $region23: #{qfc_bn_relu_forward.3} parent=0 // pred_check_branch
    %148 = sbr.rel (%p146) target = $region25
  $region24: #{qfc_bn_relu_forward.3} parent=0 // pred_region
    %s149 = sld [smem:[#allocation3]]
    %v150 = vld [vmem:[#allocation2] sm:$0xff]
    %v151 = vld [vmem:[#allocation2 + $0x8] sm:$0xff]
    %v152 = vstv %s149
    %v153 = vmul.f32 %v152, %v150
    %v154 = vmul.f32 %v152, %v151
    %v155 = vld [vmem:[%s3] sm:$0x1]
    %v157 = vlaneseq
    %v158 = vshrl.u32 %v157, 7
    %v159 = vsub.s32 0, %v158
    %v160 = vrot.slane %v155, %v159
    %v162 = vadd.f32 %v153, %v160
    %v163 = vadd.f32 %v154, %v160
    %v164 = vmax.f32 %v162, 0.0
    %v165 = vmax.f32 %v163, 0.0
    %166 = vst [vmem:[%s4] sm:$0xff] %v164
    %167 = vst [vmem:[%s4 + $0x8] sm:$0xff] %v165
    %v168 = vlaneseq
    %v169 = vshrl.u32 %v168, 7
    %v170 = vadd.s32 %v169, 8
    %s171 = smul.u32 0, 16
    %v172 = vstv %s171
    %v173 = vadd.s32 %v169, %v172
    %v174 = vadd.s32 %v170, %v172
    %v175 = vlaneseq
    %v176 = vand.u32 %v175, 127
    %s177 = smul.u32 0, 128
    %v178 = vstv %s177
    %v179 = vadd.s32 %v176, %v178
    %vm180 = vcmp.lt.s32.totalorder %v173, 8
    %vm181 = vcmp.lt.s32.totalorder %v174, 8
    %vm182 = vcmp.lt.s32.totalorder %v179, 32
    %vm183 = vmand %vm180, %vm182
    %vm184 = vmand %vm181, %vm182
    %v185 = vsel %vm183, %v164, 0.0
    %v186 = vsel %vm184, %v165, 0.0
    %v187 = vmax.f32 %v185, %v186
    %188 = vmax.xlane.f32.xlu0 %v187
    %v189 = vpop.xlane.xlu0 %188
    %v190 = vrot.slane %v189, 4
    %v191 = vmax.f32 %v189, %v190
    %v192 = vrot.slane %v191, 2
    %v193 = vmax.f32 %v191, %v192
    %v194 = vrot.slane %v193, 1
    %v195 = vmax.f32 %v193, %v194
    %s196 = vtos %v195
    %v197 = vstv %s196
    %198 = vst [vmem:[%s5] sm:$0xff] %v197
  $region25: #{qfc_bn_relu_forward.3} parent=0 // pred_fallthru
    _
  // Predicated region
  $region26: #{qfc_bn_relu_forward.3} parent=0 // pred_check
    _
  $region27: #{qfc_bn_relu_forward.3} parent=0 // pred_check_branch
    %200 = sbr.rel (0) target = $region29
  $region28: #{qfc_bn_relu_forward.3} parent=0 // pred_region
    _
  $region29: #{qfc_bn_relu_forward.3} parent=0 // pred_fallthru
    _
  // Predicated region
  $region30: #{qfc_bn_relu_forward.3} parent=0 // pred_check
    _
  $region31: #{qfc_bn_relu_forward.3} parent=0 // pred_check_branch
    %202 = sbr.rel (0) target = $region33
  $region32: #{qfc_bn_relu_forward.3} parent=0 // pred_region
    _
  $region33: #{qfc_bn_relu_forward.3} parent=0 // pred_fallthru
    _
  // Predicated region
  $region34: #{qfc_bn_relu_forward.3} parent=0 // pred_check
    _
  $region35: #{qfc_bn_relu_forward.3} parent=0 // pred_check_branch
    %204 = sbr.rel (0) target = $region37
  $region36: #{qfc_bn_relu_forward.3} parent=0 // pred_region
    _
  $region37: #{qfc_bn_relu_forward.3} parent=0 // pred_fallthru
    _
  // Predicated region
  $region38: #{qfc_bn_relu_forward.3} parent=0 // pred_check
    _
  $region39: #{qfc_bn_relu_forward.3} parent=0 // pred_check_branch
    %206 = sbr.rel (0) target = $region41
  $region40: #{qfc_bn_relu_forward.3} parent=0 // pred_region
    _
  $region41: #{qfc_bn_relu_forward.3} parent=0 // pred_fallthru
    _

// kernel: qfc_bn_relu_forward.2
$region0: #{qfc_bn_relu_forward.2}
  #allocation0 [shape = 'u32[]', space=smem, size = 0x4, offset = 0x4, fixed_abs, tag = 'smem constant byte address 0x4 - core index']
  #allocation1 [shape = 'u32[144,128]{1,0:T(1,128)}', space=vmem, size = 0x12000, scoped, tag = 'internal scratch']
  #allocation2 [shape = 'f32[16,128]{1,0:T(8,128)}', space=vmem, size = 0x2000, scoped, tag = 'scratch operand']
  #allocation3 [shape = 'f32[2]{0:T(128)}', space=smem, size = 0x200, scoped, tag = 'scratch operand']
  #allocation4 [shape = 'f32[1]{0:T(128)S(6)}', space=smem, size = 0x200, scoped, tag = 'scoped memory for qfc_bn_relu_forward.2']
  %s0 = inlined_call_operand.<no memory space> [shape: f32[1], index: 0, kind: input, shape index: {}]
  %s1 = inlined_call_operand.vmem [shape: bf16[16,128], index: 1, kind: input, shape index: {}]
  %s2 = inlined_call_operand.vmem [shape: bf16[128,128], index: 2, kind: input, shape index: {}]
  %s3 = inlined_call_operand.vmem [shape: bf16[128,128], index: 3, kind: input, shape index: {}]
  %s4 = inlined_call_operand.vmem [shape: f32[1,128], index: 4, kind: input, shape index: {}]
  %s5 = inlined_call_operand.vmem [shape: f32[8,128], index: 5, kind: output, shape index: {}]
  %s6 = sld [smem:[#allocation0]]
  $region46: #{qfc_bn_relu_forward.2} parent=0
    _
  %s8 = ssub.s32 1, %s6
  %s9 = scalar_select 0, %s8, %s6
  %10 = sst [smem:[#allocation4]] %s0
  // Predicated region
  $region2: #{qfc_bn_relu_forward.2} parent=0 // pred_check
    _
  $region3: #{qfc_bn_relu_forward.2} parent=0 // pred_check_branch
    %12 = sbr.rel (0) target = $region5
  $region4: #{qfc_bn_relu_forward.2} parent=0 // pred_region
    _
  $region5: #{qfc_bn_relu_forward.2} parent=0 // pred_fallthru
    _
  // Predicated region
  $region6: #{qfc_bn_relu_forward.2} parent=0 // pred_check
    _
  $region7: #{qfc_bn_relu_forward.2} parent=0 // pred_check_branch
    %14 = sbr.rel (0) target = $region9
  $region8: #{qfc_bn_relu_forward.2} parent=0 // pred_region
    _
  $region9: #{qfc_bn_relu_forward.2} parent=0 // pred_fallthru
    _
  // Predicated region
  $region10: #{qfc_bn_relu_forward.2} parent=0 // pred_check
    _
  $region11: #{qfc_bn_relu_forward.2} parent=0 // pred_check_branch
    %16 = sbr.rel (0) target = $region13
  $region12: #{qfc_bn_relu_forward.2} parent=0 // pred_region
    _
  $region13: #{qfc_bn_relu_forward.2} parent=0 // pred_fallthru
    _
  // Predicated region
  $region14: #{qfc_bn_relu_forward.2} parent=0 // pred_check
    _
  $region15: #{qfc_bn_relu_forward.2} parent=0 // pred_check_branch
    %18 = sbr.rel (0) target = $region17
  $region16: #{qfc_bn_relu_forward.2} parent=0 // pred_region
    _
  $region17: #{qfc_bn_relu_forward.2} parent=0 // pred_fallthru
    _
  // Predicated region
  $region18: #{qfc_bn_relu_forward.2} parent=0 // pred_check
    _
  $region19: #{qfc_bn_relu_forward.2} parent=0 // pred_check_branch
    %20 = sbr.rel (0) target = $region21
  $region20: #{qfc_bn_relu_forward.2} parent=0 // pred_region
    _
  $region21: #{qfc_bn_relu_forward.2} parent=0 // pred_fallthru
    _
  %p22 = scmp.eq.s32.totalorder 0, 0
  %p23 = scmp.eq.s32.totalorder 0, 0
  %p24 = pnand %p22, %p23
  %p25 = pneg %p24
  // Predicated region
  $region22: #{qfc_bn_relu_forward.2} parent=0 // pred_check
    _
  $region23: #{qfc_bn_relu_forward.2} parent=0 // pred_check_branch
    %27 = sbr.rel (%p24) target = $region25
  $region24: #{qfc_bn_relu_forward.2} parent=0 // pred_region
    %s28 = scalar_lea.smem [#allocation3], 0
    %29 = sst [smem:[%s28]] 0.0
    %s30 = scalar_lea.smem [#allocation3], 1
    %31 = sst [smem:[%s30]] 0.0
  $region25: #{qfc_bn_relu_forward.2} parent=0 // pred_fallthru
    _
  // Predicated region
  $region26: #{qfc_bn_relu_forward.2} parent=0 // pred_check
    %p32 = pneg %p23
  $region27: #{qfc_bn_relu_forward.2} parent=0 // pred_check_branch
    %34 = sbr.rel (%p32) target = $region29
  $region28: #{qfc_bn_relu_forward.2} parent=0 // pred_region
    %35 = vst [vmem:[#allocation2] sm:$0xff] 0.0
    %36 = vst [vmem:[#allocation2 + $0x8] sm:$0xff] 0.0
  $region29: #{qfc_bn_relu_forward.2} parent=0 // pred_fallthru
    _
  %v37 = vld [vmem:[%s1] sm:$0xf]
  %v38 = vld [vmem:[%s1 + $0x4] sm:$0xf]
  %v39 = vld [vmem:[#allocation2] sm:$0xff]
  %v40 = vld [vmem:[#allocation2 + $0x8] sm:$0xff]
  %v41 = vld [vmem:[%s2] sm:$0xf]
  %v42 = vld [vmem:[%s2 + $0x4] sm:$0xf]
  %v43 = vld [vmem:[%s2 + $0x8] sm:$0xf]
  %v44 = vld [vmem:[%s2 + $0xc] sm:$0xf]
  %v45 = vld [vmem:[%s2 + $0x10] sm:$0xf]
  %v46 = vld [vmem:[%s2 + $0x14] sm:$0xf]
  %v47 = vld [vmem:[%s2 + $0x18] sm:$0xf]
  %v48 = vld [vmem:[%s2 + $0x1c] sm:$0xf]
  %v49 = vld [vmem:[%s2 + $0x20] sm:$0xf]
  %v50 = vld [vmem:[%s2 + $0x24] sm:$0xf]
  %v51 = vld [vmem:[%s2 + $0x28] sm:$0xf]
  %v52 = vld [vmem:[%s2 + $0x2c] sm:$0xf]
  %v53 = vld [vmem:[%s2 + $0x30] sm:$0xf]
  %v54 = vld [vmem:[%s2 + $0x34] sm:$0xf]
  %v55 = vld [vmem:[%s2 + $0x38] sm:$0xf]
  %v56 = vld [vmem:[%s2 + $0x3c] sm:$0xf]
  %v57 = vld [vmem:[%s3] sm:$0xf]
  %v58 = vld [vmem:[%s3 + $0x4] sm:$0xf]
  %v59 = vld [vmem:[%s3 + $0x8] sm:$0xf]
  %v60 = vld [vmem:[%s3 + $0xc] sm:$0xf]
  %v61 = vld [vmem:[%s3 + $0x10] sm:$0xf]
  %v62 = vld [vmem:[%s3 + $0x14] sm:$0xf]
  %v63 = vld [vmem:[%s3 + $0x18] sm:$0xf]
  %v64 = vld [vmem:[%s3 + $0x1c] sm:$0xf]
  %v65 = vld [vmem:[%s3 + $0x20] sm:$0xf]
  %v66 = vld [vmem:[%s3 + $0x24] sm:$0xf]
  %v67 = vld [vmem:[%s3 + $0x28] sm:$0xf]
  %v68 = vld [vmem:[%s3 + $0x2c] sm:$0xf]
  %v69 = vld [vmem:[%s3 + $0x30] sm:$0xf]
  %v70 = vld [vmem:[%s3 + $0x34] sm:$0xf]
  %v71 = vld [vmem:[%s3 + $0x38] sm:$0xf]
  %v72 = vld [vmem:[%s3 + $0x3c] sm:$0xf]
  %v75 = vunpack.c.l.b16 %v37
  %v76 = vunpack.c.l.b16 %v38
  %v77 = vpack.c.b16 %v76, %v75
  %v95 = vunpack.c.l.b16 %v57
  %v96 = vunpack.c.l.b16 %v58
  %v97 = vunpack.c.l.b16 %v59
  %v98 = vunpack.c.l.b16 %v60
  %v99 = vunpack.c.l.b16 %v61
  %v100 = vunpack.c.l.b16 %v62
  %v101 = vunpack.c.l.b16 %v63
  %v102 = vunpack.c.l.b16 %v64
  %v103 = vunpack.c.l.b16 %v65
  %v104 = vunpack.c.l.b16 %v66
  %v105 = vunpack.c.l.b16 %v67
  %v106 = vunpack.c.l.b16 %v68
  %v107 = vunpack.c.l.b16 %v69
  %v108 = vunpack.c.l.b16 %v70
  %v109 = vunpack.c.l.b16 %v71
  %v110 = vunpack.c.l.b16 %v72
  %v111 = vpack.c.b16 %v96, %v95
  %v112 = vpack.c.b16 %v98, %v97
  %v113 = vpack.c.b16 %v100, %v99
  %v114 = vpack.c.b16 %v102, %v101
  %v115 = vpack.c.b16 %v104, %v103
  %v116 = vpack.c.b16 %v106, %v105
  %v117 = vpack.c.b16 %v108, %v107
  %v118 = vpack.c.b16 %v110, %v109
  %127 = vmatprep.subr.bf16.mxu0 0
  %128 = vmatpush1.bf16.msra.mxu0 %v111
  %129 = vmatprep.subr.bf16.mxu0 0
  %130 = vmatpush1.bf16.msra.mxu0 %v112
  %131 = vmatprep.subr.bf16.mxu0 0
  %132 = vmatpush1.bf16.msra.mxu0 %v113
  %133 = vmatprep.subr.bf16.mxu0 0
  %134 = vmatpush1.bf16.msra.mxu0 %v114
  %135 = vmatprep.subr.bf16.mxu0 0
  %136 = vmatpush1.bf16.msra.mxu0 %v115
  %137 = vmatprep.subr.bf16.mxu0 0
  %138 = vmatpush1.bf16.msra.mxu0 %v116
  %139 = vmatprep.subr.bf16.mxu0 0
  %140 = vmatpush1.bf16.msra.mxu0 %v117
  %141 = vmatprep.subr.bf16.mxu0 0
  %142 = vmatpush1.bf16.msra.mxu0 %v118
  %143 = vmatprep.subr.bf16.mxu0 0
  %144 = vmatpush1.bf16.msra.mxu0 0
  %145 = vmatprep.subr.bf16.mxu0 0
  %146 = vmatpush1.bf16.msra.mxu0 0
  %147 = vmatprep.subr.bf16.mxu0 0
  %148 = vmatpush1.bf16.msra.mxu0 0
  %149 = vmatprep.subr.bf16.mxu0 0
  %150 = vmatpush1.bf16.msra.mxu0 0
  %151 = vmatprep.subr.bf16.mxu0 0
  %152 = vmatpush1.bf16.msra.mxu0 0
  %153 = vmatprep.subr.bf16.mxu0 0
  %154 = vmatpush1.bf16.msra.mxu0 0
  %155 = vmatprep.subr.bf16.mxu0 0
  %156 = vmatpush1.bf16.msra.mxu0 0
  %157 = vmatprep.subr.bf16.mxu0 0
  %158 = vmatpush1.bf16.msra.mxu0 0
  %159 = vmatprep.mubr.bf16.mxu0 0
  %160 = vmatmul.mubr.bf16.gmra.mrb[0].mxu0 %v77
  %v161 = vpop.f32.mrb[0].mxu0
  %v162 = vadd.f32 0.0, %v161
  %v163 = vpop.f32.mrb[0].mxu0
  %v164 = vpop.f32.mrb[0].mxu0
  %v165 = vadd.f32 0.0, %v164
  %v166 = vpop.f32.mrb[0].mxu0
  %167 = vdwg.mxu0
  %v184 = vunpack.c.l.b16 %v41
  %v185 = vunpack.c.l.b16 %v42
  %v186 = vunpack.c.l.b16 %v43
  %v187 = vunpack.c.l.b16 %v44
  %v188 = vunpack.c.l.b16 %v45
  %v189 = vunpack.c.l.b16 %v46
  %v190 = vunpack.c.l.b16 %v47
  %v191 = vunpack.c.l.b16 %v48
  %v192 = vunpack.c.l.b16 %v49
  %v193 = vunpack.c.l.b16 %v50
  %v194 = vunpack.c.l.b16 %v51
  %v195 = vunpack.c.l.b16 %v52
  %v196 = vunpack.c.l.b16 %v53
  %v197 = vunpack.c.l.b16 %v54
  %v198 = vunpack.c.l.b16 %v55
  %v199 = vunpack.c.l.b16 %v56
  %v200 = vpack.c.b16 %v185, %v184
  %v201 = vpack.c.b16 %v187, %v186
  %v202 = vpack.c.b16 %v189, %v188
  %v203 = vpack.c.b16 %v191, %v190
  %v204 = vpack.c.b16 %v193, %v192
  %v205 = vpack.c.b16 %v195, %v194
  %v206 = vpack.c.b16 %v197, %v196
  %v207 = vpack.c.b16 %v199, %v198
  %216 = vmatprep.subr.bf16.mxu0 0
  %217 = vmatpush1.bf16.msra.mxu0 %v200
  %218 = vmatprep.subr.bf16.mxu0 0
  %219 = vmatpush1.bf16.msra.mxu0 %v201
  %220 = vmatprep.subr.bf16.mxu0 0
  %221 = vmatpush1.bf16.msra.mxu0 %v202
  %222 = vmatprep.subr.bf16.mxu0 0
  %223 = vmatpush1.bf16.msra.mxu0 %v203
  %224 = vmatprep.subr.bf16.mxu0 0
  %225 = vmatpush1.bf16.msra.mxu0 %v204
  %226 = vmatprep.subr.bf16.mxu0 0
  %227 = vmatpush1.bf16.msra.mxu0 %v205
  %228 = vmatprep.subr.bf16.mxu0 0
  %229 = vmatpush1.bf16.msra.mxu0 %v206
  %230 = vmatprep.subr.bf16.mxu0 0
  %231 = vmatpush1.bf16.msra.mxu0 %v207
  %232 = vmatprep.subr.bf16.mxu0 0
  %233 = vmatpush1.bf16.msra.mxu0 0
  %234 = vmatprep.subr.bf16.mxu0 0
  %235 = vmatpush1.bf16.msra.mxu0 0
  %236 = vmatprep.subr.bf16.mxu0 0
  %237 = vmatpush1.bf16.msra.mxu0 0
  %238 = vmatprep.subr.bf16.mxu0 0
  %239 = vmatpush1.bf16.msra.mxu0 0
  %240 = vmatprep.subr.bf16.mxu0 0
  %241 = vmatpush1.bf16.msra.mxu0 0
  %242 = vmatprep.subr.bf16.mxu0 0
  %243 = vmatpush1.bf16.msra.mxu0 0
  %244 = vmatprep.subr.bf16.mxu0 0
  %245 = vmatpush1.bf16.msra.mxu0 0
  %246 = vmatprep.subr.bf16.mxu0 0
  %247 = vmatpush1.bf16.msra.mxu0 0
  %248 = vmatprep.mubr.bf16.mxu0 0
  %249 = vmatmul.mubr.bf16.gmra.mrb[0].mxu0 %v77
  %v250 = vpop.f32.mrb[0].mxu0
  %v251 = vadd.f32 %v162, %v250
  %v252 = vpop.f32.mrb[0].mxu0
  %v253 = vpop.f32.mrb[0].mxu0
  %v254 = vadd.f32 %v165, %v253
  %v255 = vpop.f32.mrb[0].mxu0
  %256 = vdwg.mxu0
  %v257 = vadd.f32 %v39, %v251
  %v258 = vadd.f32 %v40, %v254
  %259 = vst [vmem:[#allocation2] sm:$0xff] %v257
  %260 = vst [vmem:[#allocation2 + $0x8] sm:$0xff] %v258
  // Predicated region
  $region30: #{qfc_bn_relu_forward.2} parent=0 // pred_check
    %p261 = pneg %p23
  $region31: #{qfc_bn_relu_forward.2} parent=0 // pred_check_branch
    %263 = sbr.rel (%p261) target = $region33
  $region32: #{qfc_bn_relu_forward.2} parent=0 // pred_region
    %s264 = sld [smem:[#allocation4]]
    %v265 = vld [vmem:[#allocation2] sm:$0xff]
    %v266 = vld [vmem:[#allocation2 + $0x8] sm:$0xff]
    %v267 = vstv %s264
    %v268 = vmul.f32 %v267, %v265
    %v269 = vmul.f32 %v267, %v266
    %v270 = vld [vmem:[%s4] sm:$0x1]
    %v272 = vlaneseq
    %v273 = vshrl.u32 %v272, 7
    %v274 = vsub.s32 0, %v273
    %v275 = vrot.slane %v270, %v274
    %v277 = vadd.f32 %v268, %v275
    %v278 = vadd.f32 %v269, %v275
    %v279 = vlaneseq
    %v280 = vshrl.u32 %v279, 7
    %v281 = vadd.s32 %v280, 8
    %s282 = smul.u32 0, 16
    %v283 = vstv %s282
    %v284 = vadd.s32 %v280, %v283
    %v285 = vadd.s32 %v281, %v283
    %v286 = vlaneseq
    %v287 = vand.u32 %v286, 127
    %s288 = smul.u32 0, 128
    %v289 = vstv %s288
    %v290 = vadd.s32 %v287, %v289
    %vm291 = vcmp.lt.s32.totalorder %v284, 8
    %vm292 = vcmp.lt.s32.totalorder %v285, 8
    %vm293 = vcmp.lt.s32.totalorder %v290, 32
    %vm294 = vmand %vm291, %vm293
    %vm295 = vmand %vm292, %vm293
    %v296 = vsel %vm294, %v277, 0.0
    %v297 = vsel %vm295, %v278, 0.0
    %s298 = sld [smem:[#allocation3]]
    %v299 = vadd.f32 %v296, %v297
    %300 = vadd.xlane.f32.xlu0 %v299
    %v301 = vpop.xlane.xlu0 %300
    %v302 = vrot.slane %v301, 4
    %v303 = vadd.f32 %v301, %v302
    %v304 = vrot.slane %v303, 2
    %v305 = vadd.f32 %v303, %v304
    %v306 = vrot.slane %v305, 1
    %v307 = vadd.f32 %v305, %v306
    %s308 = vtos %v307
    %s309 = sadd.f32 %s298, %s308
    %s310 = scalar_lea.smem [#allocation3], 0
    %311 = sst [smem:[%s310]] %s309
    %s312 = sld [smem:[#allocation3 + $0x1]]
    %v313 = vmul.f32 %v296, %v296
    %v314 = vmul.f32 %v297, %v297
    %v315 = vadd.f32 %v313, %v314
    %316 = vadd.xlane.f32.xlu0 %v315
    %v317 = vpop.xlane.xlu0 %316
    %v318 = vrot.slane %v317, 4
    %v319 = vadd.f32 %v317, %v318
    %v320 = vrot.slane %v319, 2
    %v321 = vadd.f32 %v319, %v320
    %v322 = vrot.slane %v321, 1
    %v323 = vadd.f32 %v321, %v322
    %s324 = vtos %v323
    %s325 = sadd.f32 %s312, %s324
    %s326 = scalar_lea.smem [#allocation3], 1
    %327 = sst [smem:[%s326]] %s325
  $region33: #{qfc_bn_relu_forward.2} parent=0 // pred_fallthru
    _
  // Predicated region
  $region34: #{qfc_bn_relu_forward.2} parent=0 // pred_check
    _
  $region35: #{qfc_bn_relu_forward.2} parent=0 // pred_check_branch
    %329 = sbr.rel (%p24) target = $region37
  $region36: #{qfc_bn_relu_forward.2} parent=0 // pred_region
    %v330 = vlaneseq
    %v331 = vshrl.u32 %v330, 7
    %v332 = vlaneseq
    %v333 = vand.u32 %v332, 127
    %vm334 = vcmp.eq.s32.totalorder %v331, 0
    %vm335 = vcmp.eq.s32.totalorder %v333, 0
    %vm336 = vmand %vm334, %vm335
    %s337 = sld [smem:[#allocation3]]
    %vm338 = vcmp.eq.s32.totalorder %v333, 1
    %vm339 = vmand %vm334, %vm338
    %s340 = sld [smem:[#allocation3 + $0x1]]
    %v341 = vstv %s340
    %v342 = vsel %vm339, %v341, 0.0
    %v343 = vstv %s337
    %v344 = vsel %vm336, %v343, %v342
    %345 = vst [vmem:[%s5] sm:$0xff] %v344
  $region37: #{qfc_bn_relu_forward.2} parent=0 // pred_fallthru
    _
  // Predicated region
  $region38: #{qfc_bn_relu_forward.2} parent=0 // pred_check
    _
  $region39: #{qfc_bn_relu_forward.2} parent=0 // pred_check_branch
    %347 = sbr.rel (0) target = $region41
  $region40: #{qfc_bn_relu_forward.2} parent=0 // pred_region
    _
  $region41: #{qfc_bn_relu_forward.2} parent=0 // pred_fallthru
    _
  // Predicated region
  $region42: #{qfc_bn_relu_forward.2} parent=0 // pred_check
    _
  $region43: #{qfc_bn_relu_forward.2} parent=0 // pred_check_branch
    %349 = sbr.rel (0) target = $region45
  $region44: #{qfc_bn_relu_forward.2} parent=0 // pred_region
    _
  $region45: #{qfc_bn_relu_forward.2} parent=0 // pred_fallthru
    _

</llo_original>
